<compile_context>
chip_gen: v6e
topology: v6e:2x2x1
jax: 0.10.0
libtpu: 0.0.40
codegen_flags: <defaults>
</compile_context>

<pallas_src>
import functools

import jax
import jax.numpy as jnp
from jax.experimental import pallas as pl
from jax.experimental.pallas import tpu as pltpu

_LANE = 128      # vreg lane width  (last-dim tile)
_SUBLANE = 8     # f32 sublane height (second-to-last-dim tile)


def _round_up(n, m):
    return ((n + m - 1) // m) * m


def _pad2d(a, rows, cols):
    r, c = a.shape
    if r == rows and c == cols:
        return a
    return jnp.pad(a, ((0, rows - r), (0, cols - c)))


# ---------------------------------------------------------------------------
# Kernels
# ---------------------------------------------------------------------------
def _fused_mlp_kernel(*refs, num_hidden_layers, collect):
    """Entire MLP in one kernel: chained MXU matmuls with bias + ReLU epilogues
    fused on the VPU.  refs = [x, (w, b) * num_linear, outputs...]."""
    num_linear = num_hidden_layers + 1
    x_ref = refs[0]
    p_refs = refs[1:1 + 2 * num_linear]
    out_refs = refs[1 + 2 * num_linear:]

    h = x_ref[...]
    oi = 0
    for i in range(num_linear):
        w = p_refs[2 * i][...]
        b = p_refs[2 * i + 1][...]
        h = jnp.dot(h, w, preferred_element_type=jnp.float32) + b
        if collect:
            out_refs[oi][...] = h.astype(out_refs[oi].dtype)
            oi += 1
        if i < num_hidden_layers - 1:          # ReLU between hidden layers only
            h = jnp.maximum(h, 0.0)
            if collect:
                out_refs[oi][...] = h.astype(out_refs[oi].dtype)
                oi += 1
    if not collect:
        out_refs[0][...] = h.astype(out_refs[0].dtype)


def _tiled_linear_kernel(x_ref, w_ref, b_ref, *rest, apply_relu, emit_pre):
    """One Linear layer, (tm, tn, tk)-tiled with an f32 VMEM accumulator.
    Bias add (and optional ReLU) fused into the final-K epilogue."""
    if emit_pre:
        pre_ref, y_ref, acc_ref = rest
    else:
        y_ref, acc_ref = rest
        pre_ref = None

    @pl.when(pl.program_id(2) == 0)
    def _init():
        acc_ref[...] = jnp.zeros_like(acc_ref)

    acc_ref[...] += jnp.dot(x_ref[...], w_ref[...],
                            preferred_element_type=jnp.float32)

    @pl.when(pl.program_id(2) == pl.num_programs(2) - 1)
    def _store():
        y = acc_ref[...] + b_ref[...]
        if pre_ref is not None:
            pre_ref[...] = y.astype(pre_ref.dtype)
        if apply_relu:
            y = jnp.maximum(y, 0.0)
        y_ref[...] = y.astype(y_ref.dtype)


# ---------------------------------------------------------------------------
# pallas_call wrappers
# ---------------------------------------------------------------------------
def _output_dims(dims, pdims, num_hidden_layers, return_hiddens):
    """Logical / padded widths of each kernel output, in the same order that
    LinearClassifier.forward appends activations (one per Sequential layer)."""
    num_linear = num_hidden_layers + 1
    if not return_hiddens:
        return [dims[num_linear]], [pdims[num_linear]]
    out_d, out_p = [], []
    for li in range(num_hidden_layers):
        out_d.append(dims[li + 1]); out_p.append(pdims[li + 1])
        if li < num_hidden_layers - 1:          # the ReLU layer's output
            out_d.append(dims[li + 1]); out_p.append(pdims[li + 1])
    out_d.append(dims[num_linear]); out_p.append(pdims[num_linear])
    return out_d, out_p


def _fused_forward(params, x, num_hidden_layers, return_hiddens,
                   tm, Bp, dims, pdims, out_dims, out_pdims):
    B = x.shape[0]
    num_linear = num_hidden_layers + 1

    operands = [_pad2d(x, Bp, pdims[0])]
    in_specs = [pl.BlockSpec((tm, pdims[0]), lambda i: (i, 0))]
    for li in range(num_linear):
        w, b = params[li]
        operands.append(_pad2d(w.astype(jnp.float32), pdims[li], pdims[li + 1]))
        operands.append(_pad2d(b.astype(jnp.float32).reshape(1, -1),
                               1, pdims[li + 1]))
        in_specs.append(pl.BlockSpec((pdims[li], pdims[li + 1]),
                                     lambda i: (0, 0)))
        in_specs.append(pl.BlockSpec((1, pdims[li + 1]), lambda i: (0, 0)))

    out_shape = tuple(jax.ShapeDtypeStruct((Bp, d), jnp.float32)
                      for d in out_pdims)
    out_specs = tuple(pl.BlockSpec((tm, d), lambda i: (i, 0))
                      for d in out_pdims)

    outs = pl.pallas_call(
        functools.partial(_fused_mlp_kernel,
                          num_hidden_layers=num_hidden_layers,
                          collect=return_hiddens),
        out_shape=out_shape,
        grid_spec=pltpu.PrefetchScalarGridSpec(
            num_scalar_prefetch=0,
            grid=(Bp // tm,),
            in_specs=in_specs,
            out_specs=out_specs,
        ),
        compiler_params=pltpu.CompilerParams(
            dimension_semantics=("parallel",),   # batch tiles shard across TCs
        ),
    )(*operands)

    return [o[:B, :d] for o, d in zip(outs, out_dims)]


def _tiled_linear(x, w, b, *, apply_relu, emit_pre):
    """One Linear layer as a tiled/pipelined matmul. Returns (pre, post) when
    emit_pre (pre = before ReLU) else (post,), at logical (unpadded) shapes."""
    x = x.astype(jnp.float32)
    w = w.astype(jnp.float32)
    b = b.astype(jnp.float32).reshape(1, -1)
    B, Din = x.shape
    Dout = w.shape[1]

    tm = _LANE if B >= _LANE else _round_up(B, _SUBLANE)
    tn = 256 if Dout >= 256 else _round_up(Dout, _LANE)
    tk = 512 if Din >= 512 else _round_up(Din, _LANE)

    Bp = _round_up(B, tm)
    Dip = _round_up(Din, tk)
    Dop = _round_up(Dout, tn)

    x_p = _pad2d(x, Bp, Dip)
    w_p = _pad2d(w, Dip, Dop)
    b_p = _pad2d(b, 1, Dop)

    n_out = 2 if emit_pre else 1
    out_shape = tuple(jax.ShapeDtypeStruct((Bp, Dop), jnp.float32)
                      for _ in range(n_out))
    out_specs = tuple(pl.BlockSpec((tm, tn), lambda i, j, k: (i, j))
                      for _ in range(n_out))

    outs = pl.pallas_call(
        functools.partial(_tiled_linear_kernel,
                          apply_relu=apply_relu, emit_pre=emit_pre),
        out_shape=out_shape,
        grid_spec=pltpu.PrefetchScalarGridSpec(
            num_scalar_prefetch=0,
            grid=(Bp // tm, Dop // tn, Dip // tk),
            in_specs=[
                pl.BlockSpec((tm, tk), lambda i, j, k: (i, k)),
                pl.BlockSpec((tk, tn), lambda i, j, k: (k, j)),
                pl.BlockSpec((1, tn), lambda i, j, k: (0, j)),
            ],
            out_specs=out_specs,
            scratch_shapes=[pltpu.VMEM((tm, tn), jnp.float32)],
        ),
        compiler_params=pltpu.CompilerParams(
            dimension_semantics=("parallel", "parallel", "arbitrary"),
        ),
    )(x_p, w_p, b_p)

    return tuple(o[:B, :Dout] for o in outs)


def _layered_forward(params, x, num_hidden_layers, return_hiddens):
    acts = []
    inp = x
    for i in range(num_hidden_layers):
        w, b = params[i]
        fuse_relu = i < num_hidden_layers - 1
        emit_pre = fuse_relu and return_hiddens
        outs = _tiled_linear(inp, w, b, apply_relu=fuse_relu, emit_pre=emit_pre)
        if emit_pre:
            pre, post = outs
            acts.extend([pre, post])
            inp = post
        else:
            (y,) = outs
            if return_hiddens:
                acts.append(y)
            inp = y
    w, b = params[num_hidden_layers]
    (out,) = _tiled_linear(inp, w, b, apply_relu=False, emit_pre=False)
    acts.append(out)
    return acts


# ---------------------------------------------------------------------------
# LinearClassifier in JAX / Pallas
# ---------------------------------------------------------------------------
def init_linear_classifier_params(key, num_hidden_layers, input_size,
                                  hidden_size, output_size, init_range=0.1):
    """Matches __init_weights: W ~ U(-init_range, init_range), b = 0.
    Weights stored as [in, out] (transposed vs torch.nn.Linear)."""
    params = []
    inp = input_size
    for _ in range(num_hidden_layers):
        key, wk = jax.random.split(key)
        w = jax.random.uniform(wk, (inp, hidden_size), jnp.float32,
                               -init_range, init_range)
        params.append((w, jnp.zeros((1, hidden_size), jnp.float32)))
        inp = hidden_size
    key, wk = jax.random.split(key)
    w = jax.random.uniform(wk, (hidden_size, output_size), jnp.float32,
                           -init_range, init_range)
    params.append((w, jnp.zeros((1, output_size), jnp.float32)))
    return params


def linear_classifier_forward(params, x, num_hidden_layers, return_hiddens=True,
                              fused_vmem_budget_bytes=12 * 1024 * 1024):
    """Replicates LinearClassifier.forward: returns (activations, last) where
    `activations` has one entry per nn.Sequential layer (Linear and ReLU), or
    (None, last) when return_hiddens is False (hiddens never hit HBM)."""
    x = x.astype(jnp.float32)
    B = x.shape[0]
    num_linear = num_hidden_layers + 1

    dims = [x.shape[1]] + [params[i][0].shape[1] for i in range(num_linear)]
    pdims = [_round_up(d, _LANE) for d in dims]
    out_dims, out_pdims = _output_dims(dims, pdims, num_hidden_layers,
                                       return_hiddens)

    tm = _LANE if B >= _LANE else _round_up(B, _SUBLANE)
    Bp = _round_up(B, tm)

    # VMEM footprint estimate of the fully fused kernel (weights resident +
    # double-buffered x/output tiles).  Budget kept under the smallest default
    # scoped-VMEM (16 MiB on v5e; 32 MiB on v6e/v7x) with headroom.
    param_bytes = sum(4 * (pdims[i] * pdims[i + 1] + _SUBLANE * pdims[i + 1])
                      for i in range(num_linear))
    act_bytes = 4 * tm * (pdims[0] + sum(out_pdims))
    fused_bytes = 2 * (param_bytes + act_bytes)

    if fused_bytes <= fused_vmem_budget_bytes:
        acts = _fused_forward(params, x, num_hidden_layers, return_hiddens,
                              tm, Bp, dims, pdims, out_dims, out_pdims)
    else:
        acts = _layered_forward(params, x, num_hidden_layers, return_hiddens)

    if return_hiddens:
        return acts, acts[-1]
    return None, acts[-1]


# ---------------------------------------------------------------------------
# Demo / correctness check
# ---------------------------------------------------------------------------
if __name__ == "__main__":
    def ref_forward(params, x, num_hidden_layers):
        acts = []
        inp = x
        for i in range(num_hidden_layers):
            w, b = params[i]
            h = inp @ w + b
            acts.append(h)
            inp = h
            if i < num_hidden_layers - 1:
                r = jnp.maximum(inp, 0.0)
                acts.append(r)
                inp = r
        w, b = params[num_hidden_layers]
        out = inp @ w + b
        acts.append(out)
        return acts, out

    key = jax.random.PRNGKey(0)

    # ---- Test 1: small shapes -> fully fused single-kernel path ----
    batch, nhl, din, dh, dout = 2, 2, 32, 32, 8
    key, xk, pk = jax.random.split(key, 3)
    x = jax.random.normal(xk, (batch, din), jnp.float32)
    params = init_linear_classifier_params(pk, nhl, din, dh, dout)

    fwd = jax.jit(functools.partial(linear_classifier_forward,
                                    num_hidden_layers=nhl, return_hiddens=True))
    acts, last = fwd(params, x)
    jax.block_until_ready(last)
    jax.block_until_ready(acts)

    ref_acts, ref_last = ref_forward(params, x, nhl)
    assert len(acts) == len(ref_acts)
    for a, ra in zip(acts, ref_acts):
        assert a.shape == ra.shape
        assert bool(jnp.allclose(a, ra, atol=1e-4, rtol=1e-4))
    assert bool(jnp.allclose(last, ref_last, atol=1e-4, rtol=1e-4))

    # return_hiddens=False: only the final logits leave the fused kernel.
    fwd_nh = jax.jit(functools.partial(linear_classifier_forward,
                                       num_hidden_layers=nhl,
                                       return_hiddens=False))
    none_acts, last_nh = fwd_nh(params, x)
    jax.block_until_ready(last_nh)
    assert none_acts is None
    assert bool(jnp.allclose(last_nh, ref_last, atol=1e-4, rtol=1e-4))

    # ---- Test 2: larger shapes, budget forced to 0 -> tiled per-layer path ----
    batch2, nhl2, din2, dh2, dout2 = 160, 2, 384, 1024, 256
    key, xk2, pk2 = jax.random.split(key, 3)
    x2 = jax.random.normal(xk2, (batch2, din2), jnp.float32)
    params2 = init_linear_classifier_params(pk2, nhl2, din2, dh2, dout2)

    fwd2 = jax.jit(functools.partial(linear_classifier_forward,
                                     num_hidden_layers=nhl2,
                                     return_hiddens=True,
                                     fused_vmem_budget_bytes=0))
    acts2, last2 = fwd2(params2, x2)
    jax.block_until_ready(last2)

    ref_acts2, ref_last2 = ref_forward(params2, x2, nhl2)
    assert len(acts2) == len(ref_acts2)
    for a, ra in zip(acts2, ref_acts2):
        assert a.shape == ra.shape
        # Looser tolerance: XLA's and Mosaic's f32 MXU matmuls may use a
        # different number of bf16 passes, plus split-K accumulation order.
        assert bool(jnp.allclose(a, ra, atol=3e-2, rtol=3e-2))
    assert bool(jnp.allclose(last2, ref_last2, atol=3e-2, rtol=3e-2))

    print("KERNEL_OK")
</pallas_src>

<mosaic_0001>
module attributes {stable_mosaic.version = 11 : i64} {
  func.func @_fused_mlp_kernel(%arg0: i32, %arg1: memref<8x128xf32, #tpu.memory_space<vmem>>, %arg2: memref<128x128xf32, #tpu.memory_space<vmem>>, %arg3: memref<1x128xf32, #tpu.memory_space<vmem>>, %arg4: memref<128x128xf32, #tpu.memory_space<vmem>>, %arg5: memref<1x128xf32, #tpu.memory_space<vmem>>, %arg6: memref<128x128xf32, #tpu.memory_space<vmem>>, %arg7: memref<1x128xf32, #tpu.memory_space<vmem>>, %arg8: memref<8x128xf32, #tpu.memory_space<vmem>>, %arg9: memref<8x128xf32, #tpu.memory_space<vmem>>, %arg10: memref<8x128xf32, #tpu.memory_space<vmem>>, %arg11: memref<8x128xf32, #tpu.memory_space<vmem>>) attributes {dimension_semantics = [#tpu.dimension_semantics<parallel>], iteration_bounds = array<i64: 1>, scalar_prefetch = 0 : i64, scratch_operands = 0 : i64, tpu.core_type = #tpu.core_type<tc>, window_params = [{transform_indices = @transform_0, window_bounds = array<i64: 8, 128>}, {pipeline_mode = #tpu.pipeline_mode<synchronous>, transform_indices = @transform_1, window_bounds = array<i64: 128, 128>}, {pipeline_mode = #tpu.pipeline_mode<synchronous>, transform_indices = @transform_2, window_bounds = array<i64: 1, 128>}, {pipeline_mode = #tpu.pipeline_mode<synchronous>, transform_indices = @transform_3, window_bounds = array<i64: 128, 128>}, {pipeline_mode = #tpu.pipeline_mode<synchronous>, transform_indices = @transform_4, window_bounds = array<i64: 1, 128>}, {pipeline_mode = #tpu.pipeline_mode<synchronous>, transform_indices = @transform_5, window_bounds = array<i64: 128, 128>}, {pipeline_mode = #tpu.pipeline_mode<synchronous>, transform_indices = @transform_6, window_bounds = array<i64: 1, 128>}, {transform_indices = @transform_7, window_bounds = array<i64: 8, 128>}, {transform_indices = @transform_8, window_bounds = array<i64: 8, 128>}, {transform_indices = @transform_9, window_bounds = array<i64: 8, 128>}, {transform_indices = @transform_10, window_bounds = array<i64: 8, 128>}]} {
    %c0 = arith.constant 0 : index
    %c0_0 = arith.constant 0 : index
    %0 = vector.load %arg1[%c0, %c0_0] : memref<8x128xf32, #tpu.memory_space<vmem>>, vector<8x128xf32>
    %c0_1 = arith.constant 0 : index
    %c0_2 = arith.constant 0 : index
    %1 = vector.load %arg2[%c0_1, %c0_2] : memref<128x128xf32, #tpu.memory_space<vmem>>, vector<128x128xf32>
    %c0_3 = arith.constant 0 : index
    %c0_4 = arith.constant 0 : index
    %2 = vector.load %arg3[%c0_3, %c0_4] : memref<1x128xf32, #tpu.memory_space<vmem>>, vector<1x128xf32>
    %cst = arith.constant dense<0.000000e+00> : vector<8x128xf32>
    %3 = tpu.matmul %0, %1, %cst {dimension_numbers = #tpu.dot_dimension_numbers<[1], [0], [0], [1], [0, 0, 1, 1], [], []>} : vector<8x128xf32>, vector<128x128xf32>, vector<8x128xf32> -> vector<8x128xf32>
    %4 = vector.broadcast %2 : vector<1x128xf32> to vector<8x128xf32>
    %5 = arith.addf %3, %4 : vector<8x128xf32>
    %c0_5 = arith.constant 0 : index
    %c0_6 = arith.constant 0 : index
    %6 = vector.load %arg8[%c0_5, %c0_6] : memref<8x128xf32, #tpu.memory_space<vmem>>, vector<8x128xf32>
    tpu.vector_store %arg8[%c0_5, %c0_6], %5 {strides = array<i32>} : memref<8x128xf32, #tpu.memory_space<vmem>>, vector<8x128xf32>,
    %cst_7 = arith.constant 0.000000e+00 : f32
    %7 = vector.broadcast %cst_7 : f32 to vector<8x128xf32>
    %8 = arith.maximumf %5, %7 : vector<8x128xf32>
    %c0_8 = arith.constant 0 : index
    %c0_9 = arith.constant 0 : index
    %9 = vector.load %arg9[%c0_8, %c0_9] : memref<8x128xf32, #tpu.memory_space<vmem>>, vector<8x128xf32>
    tpu.vector_store %arg9[%c0_8, %c0_9], %8 {strides = array<i32>} : memref<8x128xf32, #tpu.memory_space<vmem>>, vector<8x128xf32>,
    %c0_10 = arith.constant 0 : index
    %c0_11 = arith.constant 0 : index
    %10 = vector.load %arg4[%c0_10, %c0_11] : memref<128x128xf32, #tpu.memory_space<vmem>>, vector<128x128xf32>
    %c0_12 = arith.constant 0 : index
    %c0_13 = arith.constant 0 : index
    %11 = vector.load %arg5[%c0_12, %c0_13] : memref<1x128xf32, #tpu.memory_space<vmem>>, vector<1x128xf32>
    %cst_14 = arith.constant dense<0.000000e+00> : vector<8x128xf32>
    %12 = tpu.matmul %8, %10, %cst_14 {dimension_numbers = #tpu.dot_dimension_numbers<[1], [0], [0], [1], [0, 0, 1, 1], [], []>} : vector<8x128xf32>, vector<128x128xf32>, vector<8x128xf32> -> vector<8x128xf32>
    %13 = vector.broadcast %11 : vector<1x128xf32> to vector<8x128xf32>
    %14 = arith.addf %12, %13 : vector<8x128xf32>
    %c0_15 = arith.constant 0 : index
    %c0_16 = arith.constant 0 : index
    %15 = vector.load %arg10[%c0_15, %c0_16] : memref<8x128xf32, #tpu.memory_space<vmem>>, vector<8x128xf32>
    tpu.vector_store %arg10[%c0_15, %c0_16], %14 {strides = array<i32>} : memref<8x128xf32, #tpu.memory_space<vmem>>, vector<8x128xf32>,
    %c0_17 = arith.constant 0 : index
    %c0_18 = arith.constant 0 : index
    %16 = vector.load %arg6[%c0_17, %c0_18] : memref<128x128xf32, #tpu.memory_space<vmem>>, vector<128x128xf32>
    %c0_19 = arith.constant 0 : index
    %c0_20 = arith.constant 0 : index
    %17 = vector.load %arg7[%c0_19, %c0_20] : memref<1x128xf32, #tpu.memory_space<vmem>>, vector<1x128xf32>
    %cst_21 = arith.constant dense<0.000000e+00> : vector<8x128xf32>
    %18 = tpu.matmul %14, %16, %cst_21 {dimension_numbers = #tpu.dot_dimension_numbers<[1], [0], [0], [1], [0, 0, 1, 1], [], []>} : vector<8x128xf32>, vector<128x128xf32>, vector<8x128xf32> -> vector<8x128xf32>
    %19 = vector.broadcast %17 : vector<1x128xf32> to vector<8x128xf32>
    %20 = arith.addf %18, %19 : vector<8x128xf32>
    %c0_22 = arith.constant 0 : index
    %c0_23 = arith.constant 0 : index
    %21 = vector.load %arg11[%c0_22, %c0_23] : memref<8x128xf32, #tpu.memory_space<vmem>>, vector<8x128xf32>
    tpu.vector_store %arg11[%c0_22, %c0_23], %20 {strides = array<i32>} : memref<8x128xf32, #tpu.memory_space<vmem>>, vector<8x128xf32>,
    return
  }
  func.func @transform_0(%arg0: i32) -> (i32, i32) {
    %c0_i32 = arith.constant 0 : i32
    %c0_i32_0 = arith.constant 0 : i32
    return %arg0, %c0_i32 : i32, i32
  }
  func.func @transform_1(%arg0: i32) -> (i32, i32) {
    %c0_i32 = arith.constant 0 : i32
    %c0_i32_0 = arith.constant 0 : i32
    %c0_i32_1 = arith.constant 0 : i32
    return %c0_i32, %c0_i32_0 : i32, i32
  }
  func.func @transform_2(%arg0: i32) -> (i32, i32) {
    %c0_i32 = arith.constant 0 : i32
    %c0_i32_0 = arith.constant 0 : i32
    %c0_i32_1 = arith.constant 0 : i32
    return %c0_i32, %c0_i32_0 : i32, i32
  }
  func.func @transform_3(%arg0: i32) -> (i32, i32) {
    %c0_i32 = arith.constant 0 : i32
    %c0_i32_0 = arith.constant 0 : i32
    %c0_i32_1 = arith.constant 0 : i32
    return %c0_i32, %c0_i32_0 : i32, i32
  }
  func.func @transform_4(%arg0: i32) -> (i32, i32) {
    %c0_i32 = arith.constant 0 : i32
    %c0_i32_0 = arith.constant 0 : i32
    %c0_i32_1 = arith.constant 0 : i32
    return %c0_i32, %c0_i32_0 : i32, i32
  }
  func.func @transform_5(%arg0: i32) -> (i32, i32) {
    %c0_i32 = arith.constant 0 : i32
    %c0_i32_0 = arith.constant 0 : i32
    %c0_i32_1 = arith.constant 0 : i32
    return %c0_i32, %c0_i32_0 : i32, i32
  }
  func.func @transform_6(%arg0: i32) -> (i32, i32) {
    %c0_i32 = arith.constant 0 : i32
    %c0_i32_0 = arith.constant 0 : i32
    %c0_i32_1 = arith.constant 0 : i32
    return %c0_i32, %c0_i32_0 : i32, i32
  }
  func.func @transform_7(%arg0: i32) -> (i32, i32) {
    %c0_i32 = arith.constant 0 : i32
    %c0_i32_0 = arith.constant 0 : i32
    return %arg0, %c0_i32 : i32, i32
  }
  func.func @transform_8(%arg0: i32) -> (i32, i32) {
    %c0_i32 = arith.constant 0 : i32
    %c0_i32_0 = arith.constant 0 : i32
    return %arg0, %c0_i32 : i32, i32
  }
  func.func @transform_9(%arg0: i32) -> (i32, i32) {
    %c0_i32 = arith.constant 0 : i32
    %c0_i32_0 = arith.constant 0 : i32
    return %arg0, %c0_i32 : i32, i32
  }
  func.func @transform_10(%arg0: i32) -> (i32, i32) {
    %c0_i32 = arith.constant 0 : i32
    %c0_i32_0 = arith.constant 0 : i32
    return %arg0, %c0_i32 : i32, i32
  }
}

</mosaic_0001>

<llo_original>
// kernel: linear_classifier_forward.1
$region0: #{linear_classifier_forward.1}
  #allocation0 [shape = 'u32[]', space=smem, size = 0x4, offset = 0x4, fixed_abs, tag = 'smem constant byte address 0x4 - core index']
  #allocation1 [shape = 'u32[144,128]{1,0:T(1,128)}', space=vmem, size = 0x12000, scoped, tag = 'internal scratch']
  %s0 = inlined_call_operand.vmem [shape: f32[8,128], index: 0, kind: input, shape index: {}]
  %s1 = inlined_call_operand.vmem [shape: f32[128,128], index: 1, kind: input, shape index: {}]
  %s2 = inlined_call_operand.vmem [shape: f32[1,128], index: 2, kind: input, shape index: {}]
  %s3 = inlined_call_operand.vmem [shape: f32[128,128], index: 3, kind: input, shape index: {}]
  %s4 = inlined_call_operand.vmem [shape: f32[1,128], index: 4, kind: input, shape index: {}]
  %s5 = inlined_call_operand.vmem [shape: f32[128,128], index: 5, kind: input, shape index: {}]
  %s6 = inlined_call_operand.vmem [shape: f32[1,128], index: 6, kind: input, shape index: {}]
  %s7 = inlined_call_operand.vmem [shape: f32[8,128], index: 7, kind: output, shape index: {0}]
  %s8 = inlined_call_operand.vmem [shape: f32[8,128], index: 8, kind: output, shape index: {1}]
  %s9 = inlined_call_operand.vmem [shape: f32[8,128], index: 9, kind: output, shape index: {2}]
  %s10 = inlined_call_operand.vmem [shape: f32[8,128], index: 10, kind: output, shape index: {3}]
  %11 = xla_tuple %s7, %s8, %s9, %s10
  %s12 = sld [smem:[#allocation0]]
  $region62: #{linear_classifier_forward.1} parent=0
    _
  %s14 = ssub.s32 1, %s12
  %s15 = scalar_select 0, %s14, %s12
  // Predicated region
  $region2: #{linear_classifier_forward.1} parent=0 // pred_check
    _
  $region3: #{linear_classifier_forward.1} parent=0 // pred_check_branch
    %17 = sbr.rel (0) target = $region5
  $region4: #{linear_classifier_forward.1} parent=0 // pred_region
    _
  $region5: #{linear_classifier_forward.1} parent=0 // pred_fallthru
    _
  // Predicated region
  $region6: #{linear_classifier_forward.1} parent=0 // pred_check
    _
  $region7: #{linear_classifier_forward.1} parent=0 // pred_check_branch
    %19 = sbr.rel (0) target = $region9
  $region8: #{linear_classifier_forward.1} parent=0 // pred_region
    _
  $region9: #{linear_classifier_forward.1} parent=0 // pred_fallthru
    _
  // Predicated region
  $region10: #{linear_classifier_forward.1} parent=0 // pred_check
    _
  $region11: #{linear_classifier_forward.1} parent=0 // pred_check_branch
    %21 = sbr.rel (0) target = $region13
  $region12: #{linear_classifier_forward.1} parent=0 // pred_region
    _
  $region13: #{linear_classifier_forward.1} parent=0 // pred_fallthru
    _
  // Predicated region
  $region14: #{linear_classifier_forward.1} parent=0 // pred_check
    _
  $region15: #{linear_classifier_forward.1} parent=0 // pred_check_branch
    %23 = sbr.rel (0) target = $region17
  $region16: #{linear_classifier_forward.1} parent=0 // pred_region
    _
  $region17: #{linear_classifier_forward.1} parent=0 // pred_fallthru
    _
  // Predicated region
  $region18: #{linear_classifier_forward.1} parent=0 // pred_check
    _
  $region19: #{linear_classifier_forward.1} parent=0 // pred_check_branch
    %25 = sbr.rel (0) target = $region21
  $region20: #{linear_classifier_forward.1} parent=0 // pred_region
    _
  $region21: #{linear_classifier_forward.1} parent=0 // pred_fallthru
    _
  // Predicated region
  $region22: #{linear_classifier_forward.1} parent=0 // pred_check
    _
  $region23: #{linear_classifier_forward.1} parent=0 // pred_check_branch
    %27 = sbr.rel (0) target = $region25
  $region24: #{linear_classifier_forward.1} parent=0 // pred_region
    _
  $region25: #{linear_classifier_forward.1} parent=0 // pred_fallthru
    _
  // Predicated region
  $region26: #{linear_classifier_forward.1} parent=0 // pred_check
    _
  $region27: #{linear_classifier_forward.1} parent=0 // pred_check_branch
    %29 = sbr.rel (0) target = $region29
  $region28: #{linear_classifier_forward.1} parent=0 // pred_region
    _
  $region29: #{linear_classifier_forward.1} parent=0 // pred_fallthru
    _
  %v30 = vld [vmem:[%s0] sm:$0xff]
  %v31 = vld [vmem:[%s1] sm:$0xff]
  %v32 = vld [vmem:[%s1 + $0x8] sm:$0xff]
  %v33 = vld [vmem:[%s1 + $0x10] sm:$0xff]
  %v34 = vld [vmem:[%s1 + $0x18] sm:$0xff]
  %v35 = vld [vmem:[%s1 + $0x20] sm:$0xff]
  %v36 = vld [vmem:[%s1 + $0x28] sm:$0xff]
  %v37 = vld [vmem:[%s1 + $0x30] sm:$0xff]
  %v38 = vld [vmem:[%s1 + $0x38] sm:$0xff]
  %v39 = vld [vmem:[%s1 + $0x40] sm:$0xff]
  %v40 = vld [vmem:[%s1 + $0x48] sm:$0xff]
  %v41 = vld [vmem:[%s1 + $0x50] sm:$0xff]
  %v42 = vld [vmem:[%s1 + $0x58] sm:$0xff]
  %v43 = vld [vmem:[%s1 + $0x60] sm:$0xff]
  %v44 = vld [vmem:[%s1 + $0x68] sm:$0xff]
  %v45 = vld [vmem:[%s1 + $0x70] sm:$0xff]
  %v46 = vld [vmem:[%s1 + $0x78] sm:$0xff]
  %v47 = vld [vmem:[%s2] sm:$0x1]
  %v49 = vlaneseq
  %v50 = vshrl.u32 %v49, 7
  %v51 = vsub.s32 0, %v50
  %v52 = vrot.slane %v47, %v51
  %54 = vmatprep.subr.mxu0 0.0
  %55 = vmatpush1.msra.mxu0 %v46
  %56 = vmatprep.subr.mxu0 0.0
  %57 = vmatpush1.msra.mxu0 %v45
  %58 = vmatprep.subr.mxu0 0.0
  %59 = vmatpush1.msra.mxu0 %v44
  %60 = vmatprep.subr.mxu0 0.0
  %61 = vmatpush1.msra.mxu0 %v43
  %62 = vmatprep.subr.mxu0 0.0
  %63 = vmatpush1.msra.mxu0 %v42
  %64 = vmatprep.subr.mxu0 0.0
  %65 = vmatpush1.msra.mxu0 %v41
  %66 = vmatprep.subr.mxu0 0.0
  %67 = vmatpush1.msra.mxu0 %v40
  %68 = vmatprep.subr.mxu0 0.0
  %69 = vmatpush1.msra.mxu0 %v39
  %70 = vmatprep.subr.mxu0 0.0
  %71 = vmatpush1.msra.mxu0 %v38
  %72 = vmatprep.subr.mxu0 0.0
  %73 = vmatpush1.msra.mxu0 %v37
  %74 = vmatprep.subr.mxu0 0.0
  %75 = vmatpush1.msra.mxu0 %v36
  %76 = vmatprep.subr.mxu0 0.0
  %77 = vmatpush1.msra.mxu0 %v35
  %78 = vmatprep.subr.mxu0 0.0
  %79 = vmatpush1.msra.mxu0 %v34
  %80 = vmatprep.subr.mxu0 0.0
  %81 = vmatpush1.msra.mxu0 %v33
  %82 = vmatprep.subr.mxu0 0.0
  %83 = vmatpush1.msra.mxu0 %v32
  %84 = vmatprep.subr.mxu0 0.0
  %85 = vmatpush1.msra.mxu0 %v31
  %86 = vmatprep.subr.mxu0 0.0
  %87 = vmatpush2.msra.mxu0 0.0
  %88 = vmatprep.subr.mxu0 0.0
  %89 = vmatpush2.msra.mxu0 0.0
  %90 = vmatprep.subr.mxu0 0.0
  %91 = vmatpush2.msra.mxu0 0.0
  %92 = vmatprep.subr.mxu0 0.0
  %93 = vmatpush2.msra.mxu0 0.0
  %94 = vmatprep.subr.mxu0 0.0
  %95 = vmatpush2.msra.mxu0 0.0
  %96 = vmatprep.subr.mxu0 0.0
  %97 = vmatpush2.msra.mxu0 0.0
  %98 = vmatprep.subr.mxu0 0.0
  %99 = vmatpush2.msra.mxu0 0.0
  %100 = vmatprep.subr.mxu0 0.0
  %101 = vmatpush2.msra.mxu0 0.0
  %102 = vmatprep.subr.mxu0 0.0
  %103 = vmatpush2.msra.mxu0 0.0
  %104 = vmatprep.subr.mxu0 0.0
  %105 = vmatpush2.msra.mxu0 0.0
  %106 = vmatprep.subr.mxu0 0.0
  %107 = vmatpush2.msra.mxu0 0.0
  %108 = vmatprep.subr.mxu0 0.0
  %109 = vmatpush2.msra.mxu0 0.0
  %110 = vmatprep.subr.mxu0 0.0
  %111 = vmatpush2.msra.mxu0 0.0
  %112 = vmatprep.subr.mxu0 0.0
  %113 = vmatpush2.msra.mxu0 0.0
  %114 = vmatprep.subr.mxu0 0.0
  %115 = vmatpush2.msra.mxu0 0.0
  %116 = vmatprep.subr.mxu0 0.0
  %117 = vmatpush2.msra.mxu0 0.0
  %118 = vmatprep.mubr.f32.mxu0 0.0
  %119 = vmatmul.mubr.f32.gmra.mxu0 %v30
  %v120 = vpop.f32.mrf.mxu0
  %v121 = vadd.f32 %v52, %v120
  %v122 = vpop.f32.mrf.mxu0
  %123 = vdwg.mxu0
  %124 = vst [vmem:[%s7] sm:$0xff] %v121
  %v125 = vmax.f32 %v121, 0.0
  %126 = vst [vmem:[%s8] sm:$0xff] %v125
  %v127 = vld [vmem:[%s3] sm:$0xff]
  %v128 = vld [vmem:[%s3 + $0x8] sm:$0xff]
  %v129 = vld [vmem:[%s3 + $0x10] sm:$0xff]
  %v130 = vld [vmem:[%s3 + $0x18] sm:$0xff]
  %v131 = vld [vmem:[%s3 + $0x20] sm:$0xff]
  %v132 = vld [vmem:[%s3 + $0x28] sm:$0xff]
  %v133 = vld [vmem:[%s3 + $0x30] sm:$0xff]
  %v134 = vld [vmem:[%s3 + $0x38] sm:$0xff]
  %v135 = vld [vmem:[%s3 + $0x40] sm:$0xff]
  %v136 = vld [vmem:[%s3 + $0x48] sm:$0xff]
  %v137 = vld [vmem:[%s3 + $0x50] sm:$0xff]
  %v138 = vld [vmem:[%s3 + $0x58] sm:$0xff]
  %v139 = vld [vmem:[%s3 + $0x60] sm:$0xff]
  %v140 = vld [vmem:[%s3 + $0x68] sm:$0xff]
  %v141 = vld [vmem:[%s3 + $0x70] sm:$0xff]
  %v142 = vld [vmem:[%s3 + $0x78] sm:$0xff]
  %v143 = vld [vmem:[%s4] sm:$0x1]
  %v145 = vlaneseq
  %v146 = vshrl.u32 %v145, 7
  %v147 = vsub.s32 0, %v146
  %v148 = vrot.slane %v143, %v147
  %150 = vmatprep.subr.mxu0 0.0
  %151 = vmatpush1.msra.mxu0 %v142
  %152 = vmatprep.subr.mxu0 0.0
  %153 = vmatpush1.msra.mxu0 %v141
  %154 = vmatprep.subr.mxu0 0.0
  %155 = vmatpush1.msra.mxu0 %v140
  %156 = vmatprep.subr.mxu0 0.0
  %157 = vmatpush1.msra.mxu0 %v139
  %158 = vmatprep.subr.mxu0 0.0
  %159 = vmatpush1.msra.mxu0 %v138
  %160 = vmatprep.subr.mxu0 0.0
  %161 = vmatpush1.msra.mxu0 %v137
  %162 = vmatprep.subr.mxu0 0.0
  %163 = vmatpush1.msra.mxu0 %v136
  %164 = vmatprep.subr.mxu0 0.0
  %165 = vmatpush1.msra.mxu0 %v135
  %166 = vmatprep.subr.mxu0 0.0
  %167 = vmatpush1.msra.mxu0 %v134
  %168 = vmatprep.subr.mxu0 0.0
  %169 = vmatpush1.msra.mxu0 %v133
  %170 = vmatprep.subr.mxu0 0.0
  %171 = vmatpush1.msra.mxu0 %v132
  %172 = vmatprep.subr.mxu0 0.0
  %173 = vmatpush1.msra.mxu0 %v131
  %174 = vmatprep.subr.mxu0 0.0
  %175 = vmatpush1.msra.mxu0 %v130
  %176 = vmatprep.subr.mxu0 0.0
  %177 = vmatpush1.msra.mxu0 %v129
  %178 = vmatprep.subr.mxu0 0.0
  %179 = vmatpush1.msra.mxu0 %v128
  %180 = vmatprep.subr.mxu0 0.0
  %181 = vmatpush1.msra.mxu0 %v127
  %182 = vmatprep.subr.mxu0 0.0
  %183 = vmatpush2.msra.mxu0 0.0
  %184 = vmatprep.subr.mxu0 0.0
  %185 = vmatpush2.msra.mxu0 0.0
  %186 = vmatprep.subr.mxu0 0.0
  %187 = vmatpush2.msra.mxu0 0.0
  %188 = vmatprep.subr.mxu0 0.0
  %189 = vmatpush2.msra.mxu0 0.0
  %190 = vmatprep.subr.mxu0 0.0
  %191 = vmatpush2.msra.mxu0 0.0
  %192 = vmatprep.subr.mxu0 0.0
  %193 = vmatpush2.msra.mxu0 0.0
  %194 = vmatprep.subr.mxu0 0.0
  %195 = vmatpush2.msra.mxu0 0.0
  %196 = vmatprep.subr.mxu0 0.0
  %197 = vmatpush2.msra.mxu0 0.0
  %198 = vmatprep.subr.mxu0 0.0
  %199 = vmatpush2.msra.mxu0 0.0
  %200 = vmatprep.subr.mxu0 0.0
  %201 = vmatpush2.msra.mxu0 0.0
  %202 = vmatprep.subr.mxu0 0.0
  %203 = vmatpush2.msra.mxu0 0.0
  %204 = vmatprep.subr.mxu0 0.0
  %205 = vmatpush2.msra.mxu0 0.0
  %206 = vmatprep.subr.mxu0 0.0
  %207 = vmatpush2.msra.mxu0 0.0
  %208 = vmatprep.subr.mxu0 0.0
  %209 = vmatpush2.msra.mxu0 0.0
  %210 = vmatprep.subr.mxu0 0.0
  %211 = vmatpush2.msra.mxu0 0.0
  %212 = vmatprep.subr.mxu0 0.0
  %213 = vmatpush2.msra.mxu0 0.0
  %214 = vmatprep.mubr.f32.mxu0 0.0
  %215 = vmatmul.mubr.f32.gmra.mxu0 %v125
  %v216 = vpop.f32.mrf.mxu0
  %v217 = vadd.f32 %v148, %v216
  %v218 = vpop.f32.mrf.mxu0
  %219 = vdwg.mxu0
  %220 = vst [vmem:[%s9] sm:$0xff] %v217
  %v221 = vld [vmem:[%s5] sm:$0xff]
  %v222 = vld [vmem:[%s5 + $0x8] sm:$0xff]
  %v223 = vld [vmem:[%s5 + $0x10] sm:$0xff]
  %v224 = vld [vmem:[%s5 + $0x18] sm:$0xff]
  %v225 = vld [vmem:[%s5 + $0x20] sm:$0xff]
  %v226 = vld [vmem:[%s5 + $0x28] sm:$0xff]
  %v227 = vld [vmem:[%s5 + $0x30] sm:$0xff]
  %v228 = vld [vmem:[%s5 + $0x38] sm:$0xff]
  %v229 = vld [vmem:[%s5 + $0x40] sm:$0xff]
  %v230 = vld [vmem:[%s5 + $0x48] sm:$0xff]
  %v231 = vld [vmem:[%s5 + $0x50] sm:$0xff]
  %v232 = vld [vmem:[%s5 + $0x58] sm:$0xff]
  %v233 = vld [vmem:[%s5 + $0x60] sm:$0xff]
  %v234 = vld [vmem:[%s5 + $0x68] sm:$0xff]
  %v235 = vld [vmem:[%s5 + $0x70] sm:$0xff]
  %v236 = vld [vmem:[%s5 + $0x78] sm:$0xff]
  %v237 = vld [vmem:[%s6] sm:$0x1]
  %v239 = vlaneseq
  %v240 = vshrl.u32 %v239, 7
  %v241 = vsub.s32 0, %v240
  %v242 = vrot.slane %v237, %v241
  %244 = vmatprep.subr.mxu0 0.0
  %245 = vmatpush1.msra.mxu0 %v236
  %246 = vmatprep.subr.mxu0 0.0
  %247 = vmatpush1.msra.mxu0 %v235
  %248 = vmatprep.subr.mxu0 0.0
  %249 = vmatpush1.msra.mxu0 %v234
  %250 = vmatprep.subr.mxu0 0.0
  %251 = vmatpush1.msra.mxu0 %v233
  %252 = vmatprep.subr.mxu0 0.0
  %253 = vmatpush1.msra.mxu0 %v232
  %254 = vmatprep.subr.mxu0 0.0
  %255 = vmatpush1.msra.mxu0 %v231
  %256 = vmatprep.subr.mxu0 0.0
  %257 = vmatpush1.msra.mxu0 %v230
  %258 = vmatprep.subr.mxu0 0.0
  %259 = vmatpush1.msra.mxu0 %v229
  %260 = vmatprep.subr.mxu0 0.0
  %261 = vmatpush1.msra.mxu0 %v228
  %262 = vmatprep.subr.mxu0 0.0
  %263 = vmatpush1.msra.mxu0 %v227
  %264 = vmatprep.subr.mxu0 0.0
  %265 = vmatpush1.msra.mxu0 %v226
  %266 = vmatprep.subr.mxu0 0.0
  %267 = vmatpush1.msra.mxu0 %v225
  %268 = vmatprep.subr.mxu0 0.0
  %269 = vmatpush1.msra.mxu0 %v224
  %270 = vmatprep.subr.mxu0 0.0
  %271 = vmatpush1.msra.mxu0 %v223
  %272 = vmatprep.subr.mxu0 0.0
  %273 = vmatpush1.msra.mxu0 %v222
  %274 = vmatprep.subr.mxu0 0.0
  %275 = vmatpush1.msra.mxu0 %v221
  %276 = vmatprep.subr.mxu0 0.0
  %277 = vmatpush2.msra.mxu0 0.0
  %278 = vmatprep.subr.mxu0 0.0
  %279 = vmatpush2.msra.mxu0 0.0
  %280 = vmatprep.subr.mxu0 0.0
  %281 = vmatpush2.msra.mxu0 0.0
  %282 = vmatprep.subr.mxu0 0.0
  %283 = vmatpush2.msra.mxu0 0.0
  %284 = vmatprep.subr.mxu0 0.0
  %285 = vmatpush2.msra.mxu0 0.0
  %286 = vmatprep.subr.mxu0 0.0
  %287 = vmatpush2.msra.mxu0 0.0
  %288 = vmatprep.subr.mxu0 0.0
  %289 = vmatpush2.msra.mxu0 0.0
  %290 = vmatprep.subr.mxu0 0.0
  %291 = vmatpush2.msra.mxu0 0.0
  %292 = vmatprep.subr.mxu0 0.0
  %293 = vmatpush2.msra.mxu0 0.0
  %294 = vmatprep.subr.mxu0 0.0
  %295 = vmatpush2.msra.mxu0 0.0
  %296 = vmatprep.subr.mxu0 0.0
  %297 = vmatpush2.msra.mxu0 0.0
  %298 = vmatprep.subr.mxu0 0.0
  %299 = vmatpush2.msra.mxu0 0.0
  %300 = vmatprep.subr.mxu0 0.0
  %301 = vmatpush2.msra.mxu0 0.0
  %302 = vmatprep.subr.mxu0 0.0
  %303 = vmatpush2.msra.mxu0 0.0
  %304 = vmatprep.subr.mxu0 0.0
  %305 = vmatpush2.msra.mxu0 0.0
  %306 = vmatprep.subr.mxu0 0.0
  %307 = vmatpush2.msra.mxu0 0.0
  %308 = vmatprep.mubr.f32.mxu0 0.0
  %309 = vmatmul.mubr.f32.gmra.mxu0 %v217
  %v310 = vpop.f32.mrf.mxu0
  %v311 = vadd.f32 %v242, %v310
  %v312 = vpop.f32.mrf.mxu0
  %313 = vdwg.mxu0
  %314 = vst [vmem:[%s10] sm:$0xff] %v311
  // Predicated region
  $region30: #{linear_classifier_forward.1} parent=0 // pred_check
    _
  $region31: #{linear_classifier_forward.1} parent=0 // pred_check_branch
    %316 = sbr.rel (0) target = $region33
  $region32: #{linear_classifier_forward.1} parent=0 // pred_region
    _
  $region33: #{linear_classifier_forward.1} parent=0 // pred_fallthru
    _
  // Predicated region
  $region34: #{linear_classifier_forward.1} parent=0 // pred_check
    _
  $region35: #{linear_classifier_forward.1} parent=0 // pred_check_branch
    %318 = sbr.rel (0) target = $region37
  $region36: #{linear_classifier_forward.1} parent=0 // pred_region
    _
  $region37: #{linear_classifier_forward.1} parent=0 // pred_fallthru
    _
  // Predicated region
  $region38: #{linear_classifier_forward.1} parent=0 // pred_check
    _
  $region39: #{linear_classifier_forward.1} parent=0 // pred_check_branch
    %320 = sbr.rel (0) target = $region41
  $region40: #{linear_classifier_forward.1} parent=0 // pred_region
    _
  $region41: #{linear_classifier_forward.1} parent=0 // pred_fallthru
    _
  // Predicated region
  $region42: #{linear_classifier_forward.1} parent=0 // pred_check
    _
  $region43: #{linear_classifier_forward.1} parent=0 // pred_check_branch
    %322 = sbr.rel (0) target = $region45
  $region44: #{linear_classifier_forward.1} parent=0 // pred_region
    _
  $region45: #{linear_classifier_forward.1} parent=0 // pred_fallthru
    _
  // Predicated region
  $region46: #{linear_classifier_forward.1} parent=0 // pred_check
    _
  $region47: #{linear_classifier_forward.1} parent=0 // pred_check_branch
    %324 = sbr.rel (0) target = $region49
  $region48: #{linear_classifier_forward.1} parent=0 // pred_region
    _
  $region49: #{linear_classifier_forward.1} parent=0 // pred_fallthru
    _
  // Predicated region
  $region50: #{linear_classifier_forward.1} parent=0 // pred_check
    _
  $region51: #{linear_classifier_forward.1} parent=0 // pred_check_branch
    %326 = sbr.rel (0) target = $region53
  $region52: #{linear_classifier_forward.1} parent=0 // pred_region
    _
  $region53: #{linear_classifier_forward.1} parent=0 // pred_fallthru
    _
  // Predicated region
  $region54: #{linear_classifier_forward.1} parent=0 // pred_check
    _
  $region55: #{linear_classifier_forward.1} parent=0 // pred_check_branch
    %328 = sbr.rel (0) target = $region57
  $region56: #{linear_classifier_forward.1} parent=0 // pred_region
    _
  $region57: #{linear_classifier_forward.1} parent=0 // pred_fallthru
    _
  // Predicated region
  $region58: #{linear_classifier_forward.1} parent=0 // pred_check
    _
  $region59: #{linear_classifier_forward.1} parent=0 // pred_check_branch
    %330 = sbr.rel (0) target = $region61
  $region60: #{linear_classifier_forward.1} parent=0 // pred_region
    _
  $region61: #{linear_classifier_forward.1} parent=0 // pred_fallthru
    _

</llo_original>
